<compile_context>
chip_gen: v5e
topology: v5e:2x2
jax: 0.10.0
libtpu: 0.0.40
codegen_flags: <defaults>
</compile_context>

<pallas_src>
import math
from functools import partial

import jax
import jax.numpy as jnp
from jax.experimental import pallas as pl
from jax.experimental.pallas import tpu as pltpu


def _role_pe_kernel(seed_ref, x_ref, pe_ref, o_ref, *, dropout_p, training):
    # seed_ref: SMEM (1,) int32 scalar-prefetch
    # x_ref:    VMEM (TR, C) x.dtype
    # pe_ref:   VMEM (TR, C) x.dtype  (pre-gathered, pre-scaled pos. enc.)
    # o_ref:    VMEM (TR, C) x.dtype
    y = x_ref[...] + pe_ref[...]

    if training and dropout_p > 0.0:
        # Inverted dropout via the hardware PRNG; keep iff bits >= p * 2^32.
        pltpu.prng_seed(seed_ref[0] + pl.program_id(0))
        bits = pltpu.bitcast(pltpu.prng_random_bits(y.shape), jnp.uint32)
        thr = jnp.uint32(min(int(dropout_p * 4294967296.0), 4294967295))
        keep = bits >= thr
        scale = jnp.asarray(1.0 / (1.0 - dropout_p), y.dtype)
        y = jnp.where(keep, y * scale, jnp.zeros_like(y))

    o_ref[...] = y


def role_positional_encoding(x, role_labels, emb_weight, *,
                             dropout_p=0.1, training=False, seed=0):
    """x: (B, S, D); role_labels: (B, S) or (S,) int; emb_weight: (3, D)."""
    B, S, D = x.shape

    # Hoisted gather: tiny table, batch-invariant work done once in XLA.
    pe = (emb_weight[role_labels.astype(jnp.int32)] / math.sqrt(D)).astype(x.dtype)
    pe = jnp.broadcast_to(pe, x.shape)

    total = B * S * D
    bytes_per_elem = jnp.dtype(x.dtype).itemsize

    # Lane-dense 2D view of the flattened tensors.
    if D % 128 == 0:
        C = D
    elif total % 128 == 0:
        C = 128
    else:
        # TODO(synk): lane-sparse fallback (masked stores) when total % 128 != 0.
        C = D
    R = total // C

    # Largest row tile that keeps each block <= ~4 MiB (mem-bound kernel; big
    # lane-dense tiles approach HBM roofline on v5e/v6e/v7x).
    max_block_elems = (4 * 1024 * 1024) // bytes_per_elem
    TR = max(1, min(R, max_block_elems // C))
    if TR < R:
        TR = max(8, (TR // 8) * 8)   # keep (8,128)-compatible when tiling

    x2 = x.reshape(R, C)
    pe2 = pe.reshape(R, C)
    seed_arr = jnp.array([seed], dtype=jnp.int32)

    kernel = partial(_role_pe_kernel, dropout_p=float(dropout_p),
                     training=bool(training))

    out2 = pl.pallas_call(
        kernel,
        out_shape=jax.ShapeDtypeStruct((R, C), x.dtype),
        grid_spec=pltpu.PrefetchScalarGridSpec(
            num_scalar_prefetch=1,
            grid=(pl.cdiv(R, TR),),
            in_specs=[
                pl.BlockSpec((TR, C), lambda i, seed: (i, 0)),
                pl.BlockSpec((TR, C), lambda i, seed: (i, 0)),
            ],
            out_specs=pl.BlockSpec((TR, C), lambda i, seed: (i, 0)),
        ),
        compiler_params=pltpu.CompilerParams(
            dimension_semantics=("parallel",),      # shards across v7x's 2 TCs
            vmem_limit_bytes=48 * 1024 * 1024),
    )(seed_arr, x2, pe2)

    return out2.reshape(B, S, D)


if __name__ == "__main__":
    # Small deterministic setup consistent with the module.
    B, S, D = 2, 8, 32
    NUM_ROLES = 3
    DROPOUT_P = 0.1

    key = jax.random.PRNGKey(0)
    kx, kr, kw = jax.random.split(key, 3)

    x = jax.random.normal(kx, (B, S, D), dtype=jnp.float32)
    role_labels = jax.random.randint(kr, (B, S), 0, NUM_ROLES, dtype=jnp.int32)

    # xavier_uniform_ init for nn.Embedding(3, d_model).weight
    bound = math.sqrt(6.0 / (NUM_ROLES + D))
    emb_weight = jax.random.uniform(kw, (NUM_ROLES, D), dtype=jnp.float32,
                                    minval=-bound, maxval=bound)

    # Eval-mode forward (dropout is identity); training=True uses the on-chip
    # PRNG dropout path (randomness differs from torch's RNG, as expected).
    out = role_positional_encoding(x, role_labels, emb_weight,
                                   dropout_p=DROPOUT_P, training=False)
    out = jax.block_until_ready(out)

    # Pure-JAX reference check.
    ref = x + emb_weight[role_labels] / math.sqrt(D)
    assert out.shape == (B, S, D)
    assert jnp.allclose(out, ref, atol=1e-6, rtol=1e-6), "mismatch vs reference"

    print("KERNEL_OK")
</pallas_src>

<mosaic_0001>
module attributes {stable_mosaic.version = 11 : i64} {
  func.func @_role_pe_kernel(%arg0: i32, %arg1: memref<1xi32, #tpu.memory_space<smem>>, %arg2: memref<4x128xf32, #tpu.memory_space<vmem>>, %arg3: memref<4x128xf32, #tpu.memory_space<vmem>>, %arg4: memref<4x128xf32, #tpu.memory_space<vmem>>) attributes {dimension_semantics = [#tpu.dimension_semantics<parallel>], iteration_bounds = array<i64: 1>, scalar_prefetch = 1 : i64, scratch_operands = 0 : i64, tpu.core_type = #tpu.core_type<tc>, window_params = [{transform_indices = @transform_0, window_bounds = array<i64: 4, 128>}, {transform_indices = @transform_1, window_bounds = array<i64: 4, 128>}, {transform_indices = @transform_2, window_bounds = array<i64: 4, 128>}]} {
    %c0 = arith.constant 0 : index
    %c0_0 = arith.constant 0 : index
    %0 = vector.load %arg2[%c0, %c0_0] : memref<4x128xf32, #tpu.memory_space<vmem>>, vector<4x128xf32>
    %c0_1 = arith.constant 0 : index
    %c0_2 = arith.constant 0 : index
    %1 = vector.load %arg3[%c0_1, %c0_2] : memref<4x128xf32, #tpu.memory_space<vmem>>, vector<4x128xf32>
    %2 = arith.addf %0, %1 : vector<4x128xf32>
    %c0_3 = arith.constant 0 : index
    %c0_4 = arith.constant 0 : index
    %3 = vector.load %arg4[%c0_3, %c0_4] : memref<4x128xf32, #tpu.memory_space<vmem>>, vector<4x128xf32>
    tpu.vector_store %arg4[%c0_3, %c0_4], %2 {strides = array<i32>} : memref<4x128xf32, #tpu.memory_space<vmem>>, vector<4x128xf32>,
    return
  }
  func.func @transform_0(%arg0: i32, %arg1: memref<1xi32, #tpu.memory_space<smem>>) -> (i32, i32) {
    %c0_i32 = arith.constant 0 : i32
    %c0_i32_0 = arith.constant 0 : i32
    return %arg0, %c0_i32 : i32, i32
  }
  func.func @transform_1(%arg0: i32, %arg1: memref<1xi32, #tpu.memory_space<smem>>) -> (i32, i32) {
    %c0_i32 = arith.constant 0 : i32
    %c0_i32_0 = arith.constant 0 : i32
    return %arg0, %c0_i32 : i32, i32
  }
  func.func @transform_2(%arg0: i32, %arg1: memref<1xi32, #tpu.memory_space<smem>>) -> (i32, i32) {
    %c0_i32 = arith.constant 0 : i32
    %c0_i32_0 = arith.constant 0 : i32
    return %arg0, %c0_i32 : i32, i32
  }
}

</mosaic_0001>

<llo_original>
// kernel: tpu_custom_call.1
$region0: #{tpu_custom_call.1}
  #allocation0 [shape = 'u32[]', space=smem, size = 0x4, offset = 0x4, fixed_abs, tag = 'smem constant byte address 0x4 - core index']
  #allocation1 [shape = 'u32[72,128]{1,0:T(1,128)}', space=vmem, size = 0x9000, scoped, tag = 'internal scratch']
  #allocation2 [shape = 's32[1]{0}', space=sflag, size = 0x4, scoped, tag = 'scoped memory for tpu_custom_call.1']
  #allocation3 [shape = 's32[1]{0:T(128)S(6)}', space=smem, size = 0x200, scoped, tag = 'prefetched SMEM operand 0']
  %s0 = inlined_call_operand.<no memory space> [shape: s32[1], index: 0, kind: input, shape index: {}]
  %s1 = inlined_call_operand.hbm [shape: f32[4,128], index: 1, kind: input, shape index: {}]
  %s2 = inlined_call_operand.hbm [shape: f32[4,128], index: 2, kind: input, shape index: {}]
  %s3 = inlined_call_operand.hbm [shape: f32[4,128], index: 3, kind: output, shape index: {}]
  %s4 = sld [smem:[#allocation0]]
  $region26: #{tpu_custom_call.1} parent=0
    _
  %s6 = ssub.s32 1, %s4
  %s7 = scalar_select 0, %s6, %s4
  %8 = sst [smem:[#allocation3]] %s0
  $region1: #{tpu_custom_call.1} parent=0
    #allocation4 [shape = 'u8[2048]{0}', space=vmem, size = 0x800, scoped, tag = 'input window, operand 1, single buffered']
    #allocation5 [shape = 's32[1]{0}', space=sflag, size = 0x4, scoped, tag = 'scoped memory for tpu_custom_call.1']
    #allocation6 [shape = 's32[1]{0}', space=sflag, size = 0x4, scoped, tag = 'scoped memory for tpu_custom_call.1']
    #allocation7 [shape = 'u8[2048]{0}', space=vmem, size = 0x800, scoped, tag = 'input window, operand 2, single buffered']
    #allocation8 [shape = 's32[1]{0}', space=sflag, size = 0x4, scoped, tag = 'scoped memory for tpu_custom_call.1']
    #allocation9 [shape = 'u8[2048]{0}', space=vmem, size = 0x800, scoped, tag = 'output window, operand 0, single buffered']
    %9 = vsyncpa [#allocation5], 0
    %10 = vsyncpa [#allocation8], 0
    %11 = vsyncpa [#allocation6], 0
    // Predicated region
    $region2: #{tpu_custom_call.1} parent=1 // pred_check
      _
    $region3: #{tpu_custom_call.1} parent=1 // pred_check_branch
      %13 = sbr.rel (0) target = $region5
    $region4: #{tpu_custom_call.1} parent=1 // pred_region
      %15 = vsyncadd [#allocation5], 0
      %s17 = sshll.u32 %s1, 4
      %s18 = int_to_ptr.hbm [resolvable:$true] %s17
      %s19 = sshll.u32 [#allocation4], 4
      %s20 = int_to_ptr.vmem [resolvable:$true] %s19
      %22 = dma.hbm_to_vmem [thread:$0]  %s18, 64, %s20, [#allocation5]
    $region5: #{tpu_custom_call.1} parent=1 // pred_fallthru
      _
    // Predicated region
    $region6: #{tpu_custom_call.1} parent=1 // pred_check
      _
    $region7: #{tpu_custom_call.1} parent=1 // pred_check_branch
      %24 = sbr.rel (0) target = $region9
    $region8: #{tpu_custom_call.1} parent=1 // pred_region
      %26 = vsyncadd [#allocation8], 0
      %s28 = sshll.u32 %s2, 4
      %s29 = int_to_ptr.hbm [resolvable:$true] %s28
      %s30 = sshll.u32 [#allocation7], 4
      %s31 = int_to_ptr.vmem [resolvable:$true] %s30
      %33 = dma.hbm_to_vmem [thread:$0]  %s29, 64, %s31, [#allocation8]
    $region9: #{tpu_custom_call.1} parent=1 // pred_fallthru
      _
    // Predicated region
    $region10: #{tpu_custom_call.1} parent=1 // pred_check
      _
    $region11: #{tpu_custom_call.1} parent=1 // pred_check_branch
      %35 = sbr.rel (0) target = $region13
    $region12: #{tpu_custom_call.1} parent=1 // pred_region
      %37 = dma.done [#allocation5], 64
    $region13: #{tpu_custom_call.1} parent=1 // pred_fallthru
      _
    // Predicated region
    $region14: #{tpu_custom_call.1} parent=1 // pred_check
      _
    $region15: #{tpu_custom_call.1} parent=1 // pred_check_branch
      %39 = sbr.rel (0) target = $region17
    $region16: #{tpu_custom_call.1} parent=1 // pred_region
      %41 = dma.done [#allocation8], 64
    $region17: #{tpu_custom_call.1} parent=1 // pred_fallthru
      _
    %v42 = vld [vmem:[#allocation4] sm:$0xf]
    %v43 = vld [vmem:[#allocation7] sm:$0xf]
    %v44 = vadd.f32 %v42, %v43
    %45 = vst [vmem:[#allocation9] sm:$0xf] %v44
    // Predicated region
    $region18: #{tpu_custom_call.1} parent=1 // pred_check
      _
    $region19: #{tpu_custom_call.1} parent=1 // pred_check_branch
      %47 = sbr.rel (0) target = $region21
    $region20: #{tpu_custom_call.1} parent=1 // pred_region
      %49 = vsyncadd [#allocation6], 0
      %s51 = sshll.u32 [#allocation9], 4
      %s52 = int_to_ptr.vmem [resolvable:$true] %s51
      %s53 = sshll.u32 %s3, 4
      %s54 = int_to_ptr.hbm [resolvable:$true] %s53
      %56 = dma.vmem_to_hbm [thread:$0]  %s52, 64, %s54, [#allocation6]
    $region21: #{tpu_custom_call.1} parent=1 // pred_fallthru
      _
    // Predicated region
    $region22: #{tpu_custom_call.1} parent=1 // pred_check
      _
    $region23: #{tpu_custom_call.1} parent=1 // pred_check_branch
      %58 = sbr.rel (0) target = $region25
    $region24: #{tpu_custom_call.1} parent=1 // pred_region
      %60 = dma.done [#allocation6], 64
    $region25: #{tpu_custom_call.1} parent=1 // pred_fallthru
      _
    %61 = vsyncpa [#allocation5], 1
    %62 = vsyncpa [#allocation8], 1
    %63 = vsyncpa [#allocation6], 1

</llo_original>
